<compile_context>
chip_gen: v6e
topology: v6e:2x2x1
jax: 0.10.0
libtpu: 0.0.40
codegen_flags: <defaults>
</compile_context>

<pallas_src>
import functools

import jax
import jax.numpy as jnp
from jax.experimental import pallas as pl
from jax.experimental.pallas import tpu as pltpu


K_POI = 14  # poi feature count in the original module


def _round_up(x, m):
    return ((x + m - 1) // m) * m


# ----------------------------------------------------------------------------
# Kernel
# ----------------------------------------------------------------------------
def _make_road_kernel(tile_n, layout):
    E = layout["E"]
    H = layout["H"]
    k_pad = layout["k_pad"]
    wp1_row = layout["wp1_row"]
    a_row = layout["a_row"]
    b_row = layout["b_row"]
    c_row = layout["c_row"]
    bias_row = layout["bias_row"]

    def kernel(poi_ref, dist_ref, slab_ref, out_ref):
        f32 = jnp.float32

        # --- unpack the packed weight slab with static (free) slices --------
        wp1 = slab_ref[wp1_row:wp1_row + k_pad, 0:H]      # (k_pad, H), zero-padded rows
        A = slab_ref[a_row:a_row + H, 0:E]                # folded Wp2 @ Wr1a
        B = slab_ref[b_row:b_row + H, 0:E]                # folded Wp2 @ Wr1b
        C = slab_ref[c_row:c_row + H, 0:E]                # folded Wd2 @ Wr1c
        bias = slab_ref[bias_row:bias_row + 8, :]         # aligned (8, 128) load
        bp1 = bias[0:1, 0:H]
        wd1 = bias[1:2, 0:H]
        bd1 = bias[2:3, 0:H]
        bfold = bias[3:4, 0:E]
        wr2r = bias[4:5, 0:E]
        br2 = bias[5:6, 0:1]

        # --- shared poi MLP first layer: both poi tensors in one MXU pass ---
        poi = jnp.concatenate([poi_ref[0], poi_ref[1]], axis=0)   # (2T, k_pad)
        hp = jnp.maximum(jnp.dot(poi, wp1, preferred_element_type=f32) + bp1, 0.0)
        h1 = hp[:tile_n]
        h2 = hp[tile_n:]

        # --- distance first layer: K=1 linear as a VPU broadcast mul-add ----
        hd = jnp.maximum(dist_ref[...] * wd1 + bd1, 0.0)          # (T, H)

        # --- road head first layer (poi/dist second linears folded in) ------
        h = (jnp.dot(h1, A, preferred_element_type=f32)
             + jnp.dot(h2, B, preferred_element_type=f32)
             + jnp.dot(hd, C, preferred_element_type=f32)
             + bfold)
        h = jnp.maximum(h, 0.0)

        # --- final Linear(E, 1): VPU multiply + lane reduce (no MXU pass) ---
        out = jnp.sum(h * wr2r, axis=-1, keepdims=True) + br2
        out_ref[...] = jnp.maximum(out, 0.0)

    return kernel


# ----------------------------------------------------------------------------
# Parameter preparation (one-time): algebraic fold + packing into one slab
# ----------------------------------------------------------------------------
def prepare_road_params(params):
    E = params["wp2"].shape[1]
    H = params["wp1"].shape[1]

    wr1 = params["wr1"]
    wr1a, wr1b, wr1c = wr1[:E], wr1[E:2 * E], wr1[2 * E:]

    # Fold the second poi/dist linears into the road-head first layer.
    A = params["wp2"] @ wr1a                               # (H, E)
    B = params["wp2"] @ wr1b                               # (H, E)
    C = params["wd2"] @ wr1c                               # (H, E)
    bias_fold = (params["bp2"] @ wr1a + params["bp2"] @ wr1b
                 + params["bd2"] @ wr1c + params["br1"])   # (1, E)
    wr2_row = params["wr2"].T                              # (1, E)

    lanes = max(128, _round_up(E, 128))
    k_pad = _round_up(K_POI, 8)                            # 16
    h_rows = _round_up(H, 8)

    wp1_row = 0
    a_row = wp1_row + k_pad
    b_row = a_row + h_rows
    c_row = b_row + h_rows
    bias_row = c_row + h_rows
    total_rows = bias_row + 8                              # multiple of 8

    slab = jnp.zeros((total_rows, lanes), jnp.float32)
    slab = slab.at[wp1_row:wp1_row + K_POI, 0:H].set(params["wp1"].astype(jnp.float32))
    slab = slab.at[a_row:a_row + H, 0:E].set(A.astype(jnp.float32))
    slab = slab.at[b_row:b_row + H, 0:E].set(B.astype(jnp.float32))
    slab = slab.at[c_row:c_row + H, 0:E].set(C.astype(jnp.float32))
    slab = slab.at[bias_row + 0, 0:H].set(params["bp1"][0].astype(jnp.float32))
    slab = slab.at[bias_row + 1, 0:H].set(params["wd1"][0].astype(jnp.float32))
    slab = slab.at[bias_row + 2, 0:H].set(params["bd1"][0].astype(jnp.float32))
    slab = slab.at[bias_row + 3, 0:E].set(bias_fold[0].astype(jnp.float32))
    slab = slab.at[bias_row + 4, 0:E].set(wr2_row[0].astype(jnp.float32))
    slab = slab.at[bias_row + 5, 0].set(params["br2"].reshape(()).astype(jnp.float32))

    layout = dict(E=E, H=H, k_pad=k_pad,
                  wp1_row=wp1_row, a_row=a_row, b_row=b_row, c_row=c_row,
                  bias_row=bias_row, slab_shape=(total_rows, lanes))
    return {"slab": slab, "layout": layout}


# ----------------------------------------------------------------------------
# Forward wrapper
# ----------------------------------------------------------------------------
def road_forward(poi1, poi2, distance, prepared, *, tile_n=None):
    layout = prepared["layout"]
    slab = prepared["slab"]
    k_pad = layout["k_pad"]
    N = poi1.shape[0]

    # Row tile: multiple of 8, capped at 256 rows so double-buffered tiles stay
    # tiny even on v7x's 64 MiB VMEM.  TODO(synk): for very large N, consider
    # bf16 weights/inputs on v6e/v7x (keep f32 accumulation).
    if tile_n is None:
        tile_n = min(256, _round_up(N, 8))
    n_pad = _round_up(N, tile_n)

    def pad_to(x, rows, feats):
        x = x.astype(jnp.float32)
        return jnp.pad(x, ((0, rows - x.shape[0]), (0, feats - x.shape[1])))

    # One stacked poi operand (one DMA for both poi tensors), features padded
    # 14 -> 16 so the first-layer contraction is sublane-aligned.
    poi = jnp.stack([pad_to(poi1, n_pad, k_pad),
                     pad_to(poi2, n_pad, k_pad)], axis=0)          # (2, n_pad, k_pad)
    dist = pad_to(distance, n_pad, 1)                              # (n_pad, 1)

    srows, scols = layout["slab_shape"]
    kernel = _make_road_kernel(tile_n, layout)

    out = pl.pallas_call(
        kernel,
        out_shape=jax.ShapeDtypeStruct((n_pad, 1), jnp.float32),
        grid=(n_pad // tile_n,),
        in_specs=[
            pl.BlockSpec((2, tile_n, k_pad), lambda i: (0, i, 0)),
            pl.BlockSpec((tile_n, 1), lambda i: (i, 0)),
            pl.BlockSpec((srows, scols), lambda i: (0, 0)),  # weights resident
        ],
        out_specs=pl.BlockSpec((tile_n, 1), lambda i: (i, 0)),
        compiler_params=pltpu.CompilerParams(
            dimension_semantics=("parallel",)),
    )(poi, dist, slab)

    return out[:N]


# ----------------------------------------------------------------------------
# Synthetic params + pure-JAX reference (matches the PyTorch forward exactly)
# ----------------------------------------------------------------------------
def init_params(key, emb_dim):
    """Deterministic synthetic params. Weights in [in, out] layout."""
    E, H = emb_dim, emb_dim // 2
    keys = jax.random.split(key, 10)

    def w(k, i, o, scale):
        return jax.random.normal(k, (i, o), jnp.float32) * scale

    return {
        # poi: Linear(14, H) -> ReLU -> Linear(H, E)
        "wp1": w(keys[0], 14, H, 0.2), "bp1": jnp.zeros((1, H), jnp.float32) + 0.01,
        "wp2": w(keys[1], H, E, 0.2),  "bp2": jnp.zeros((1, E), jnp.float32) + 0.01,
        # distance: Linear(1, H) -> ReLU -> Linear(H, E)
        "wd1": w(keys[2], 1, H, 0.2),  "bd1": jnp.zeros((1, H), jnp.float32) + 0.01,
        "wd2": w(keys[3], H, E, 0.2),  "bd2": jnp.zeros((1, E), jnp.float32) + 0.01,
        # road: Linear(3E, E) -> ReLU -> Linear(E, 1) -> ReLU
        "wr1": w(keys[4], 3 * E, E, 0.1), "br1": jnp.zeros((1, E), jnp.float32) + 0.01,
        "wr2": w(keys[5], E, 1, 0.1),     "br2": jnp.zeros((1, 1), jnp.float32) + 0.01,
    }


def road_reference(poi1, poi2, distance, params):
    def seq2(x, w1, b1, w2, b2):
        h = jnp.maximum(x @ w1 + b1, 0.0)
        return h @ w2 + b2

    p1 = seq2(poi1, params["wp1"], params["bp1"], params["wp2"], params["bp2"])
    p2 = seq2(poi2, params["wp1"], params["bp1"], params["wp2"], params["bp2"])
    d = seq2(distance, params["wd1"], params["bd1"], params["wd2"], params["bd2"])
    fus = jnp.concatenate((p1, p2, d), axis=1)
    h = jnp.maximum(fus @ params["wr1"] + params["br1"], 0.0)
    return jnp.maximum(h @ params["wr2"] + params["br2"], 0.0)


if __name__ == "__main__":
    N = 8          # batch
    EMB_DIM = 32   # emb_dim

    key = jax.random.PRNGKey(0)
    k_poi1, k_poi2, k_dist, k_params = jax.random.split(key, 4)

    poi1 = jax.random.normal(k_poi1, (N, 14), jnp.float32)
    poi2 = jax.random.normal(k_poi2, (N, 14), jnp.float32)
    distance = jax.random.uniform(k_dist, (N, 1), jnp.float32)

    params = init_params(k_params, EMB_DIM)
    prepared = prepare_road_params(params)

    out = road_forward(poi1, poi2, distance, prepared)
    out = jax.block_until_ready(out)

    ref = road_reference(poi1, poi2, distance, params)
    assert out.shape == (N, 1)
    assert jnp.allclose(out, ref, atol=1e-4, rtol=1e-4), "mismatch vs reference"

    print("KERNEL_OK")
</pallas_src>

<mosaic_0001>
module attributes {stable_mosaic.version = 11 : i64} {
  func.func @kernel(%arg0: i32, %arg1: memref<2x8x16xf32, #tpu.memory_space<vmem>>, %arg2: memref<8x1xf32, #tpu.memory_space<vmem>>, %arg3: memref<72x128xf32, #tpu.memory_space<vmem>>, %arg4: memref<8x1xf32, #tpu.memory_space<vmem>>) attributes {dimension_semantics = [#tpu.dimension_semantics<parallel>], iteration_bounds = array<i64: 1>, scalar_prefetch = 0 : i64, scratch_operands = 0 : i64, tpu.core_type = #tpu.core_type<tc>, window_params = [{transform_indices = @transform_0, window_bounds = array<i64: 2, 8, 16>}, {transform_indices = @transform_1, window_bounds = array<i64: 8, 1>}, {pipeline_mode = #tpu.pipeline_mode<synchronous>, transform_indices = @transform_2, window_bounds = array<i64: 72, 128>}, {transform_indices = @transform_3, window_bounds = array<i64: 8, 1>}]} {
    %c0 = arith.constant 0 : index
    %c0_0 = arith.constant 0 : index
    %0 = vector.load %arg3[%c0, %c0_0] : memref<72x128xf32, #tpu.memory_space<vmem>>, vector<16x16xf32>
    %c16 = arith.constant 16 : index
    %c0_1 = arith.constant 0 : index
    %1 = vector.load %arg3[%c16, %c0_1] : memref<72x128xf32, #tpu.memory_space<vmem>>, vector<16x32xf32>
    %c32 = arith.constant 32 : index
    %c0_2 = arith.constant 0 : index
    %2 = vector.load %arg3[%c32, %c0_2] : memref<72x128xf32, #tpu.memory_space<vmem>>, vector<16x32xf32>
    %c48 = arith.constant 48 : index
    %c0_3 = arith.constant 0 : index
    %3 = vector.load %arg3[%c48, %c0_3] : memref<72x128xf32, #tpu.memory_space<vmem>>, vector<16x32xf32>
    %c64 = arith.constant 64 : index
    %c0_4 = arith.constant 0 : index
    %4 = vector.load %arg3[%c64, %c0_4] : memref<72x128xf32, #tpu.memory_space<vmem>>, vector<8x128xf32>
    %5 = vector.extract_strided_slice %4 {offsets = [0, 0], sizes = [1, 16], strides = [1, 1]} : vector<8x128xf32> to vector<1x16xf32>
    %6 = vector.extract_strided_slice %4 {offsets = [1, 0], sizes = [1, 16], strides = [1, 1]} : vector<8x128xf32> to vector<1x16xf32>
    %7 = vector.extract_strided_slice %4 {offsets = [2, 0], sizes = [1, 16], strides = [1, 1]} : vector<8x128xf32> to vector<1x16xf32>
    %8 = vector.extract_strided_slice %4 {offsets = [3, 0], sizes = [1, 32], strides = [1, 1]} : vector<8x128xf32> to vector<1x32xf32>
    %9 = vector.extract_strided_slice %4 {offsets = [4, 0], sizes = [1, 32], strides = [1, 1]} : vector<8x128xf32> to vector<1x32xf32>
    %10 = vector.extract_strided_slice %4 {offsets = [5, 0], sizes = [1, 1], strides = [1, 1]} : vector<8x128xf32> to vector<1x1xf32>
    %c0_5 = arith.constant 0 : index
    %c0_6 = arith.constant 0 : index
    %c0_7 = arith.constant 0 : index
    %11 = vector.load %arg1[%c0_5, %c0_6, %c0_7] : memref<2x8x16xf32, #tpu.memory_space<vmem>>, vector<1x8x16xf32>
    %12 = vector.shape_cast %11 : vector<1x8x16xf32> to vector<8x16xf32>
    %c1 = arith.constant 1 : index
    %c0_8 = arith.constant 0 : index
    %c0_9 = arith.constant 0 : index
    %13 = vector.load %arg1[%c1, %c0_8, %c0_9] : memref<2x8x16xf32, #tpu.memory_space<vmem>>, vector<1x8x16xf32>
    %14 = vector.shape_cast %13 : vector<1x8x16xf32> to vector<8x16xf32>
    %15 = tpu.concatenate %12, %14 in 0 : vector<8x16xf32>, vector<8x16xf32> -> vector<16x16xf32>
    %cst = arith.constant dense<0.000000e+00> : vector<16x16xf32>
    %16 = tpu.matmul %15, %0, %cst {dimension_numbers = #tpu.dot_dimension_numbers<[1], [0], [0], [1], [0, 0, 1, 1], [], []>} : vector<16x16xf32>, vector<16x16xf32>, vector<16x16xf32> -> vector<16x16xf32>
    %17 = vector.broadcast %5 : vector<1x16xf32> to vector<16x16xf32>
    %18 = arith.addf %16, %17 : vector<16x16xf32>
    %cst_10 = arith.constant 0.000000e+00 : f32
    %19 = vector.broadcast %cst_10 : f32 to vector<16x16xf32>
    %20 = arith.maximumf %18, %19 : vector<16x16xf32>
    %21 = vector.extract_strided_slice %20 {offsets = [0, 0], sizes = [8, 16], strides = [1, 1]} : vector<16x16xf32> to vector<8x16xf32>
    %22 = vector.extract_strided_slice %20 {offsets = [8, 0], sizes = [8, 16], strides = [1, 1]} : vector<16x16xf32> to vector<8x16xf32>
    %c0_11 = arith.constant 0 : index
    %c0_12 = arith.constant 0 : index
    %23 = vector.load %arg2[%c0_11, %c0_12] : memref<8x1xf32, #tpu.memory_space<vmem>>, vector<8x1xf32>
    %24 = vector.broadcast %23 : vector<8x1xf32> to vector<8x16xf32>
    %25 = vector.broadcast %6 : vector<1x16xf32> to vector<8x16xf32>
    %26 = arith.mulf %24, %25 : vector<8x16xf32>
    %27 = vector.broadcast %7 : vector<1x16xf32> to vector<8x16xf32>
    %28 = arith.addf %26, %27 : vector<8x16xf32>
    %cst_13 = arith.constant 0.000000e+00 : f32
    %29 = vector.broadcast %cst_13 : f32 to vector<8x16xf32>
    %30 = arith.maximumf %28, %29 : vector<8x16xf32>
    %cst_14 = arith.constant dense<0.000000e+00> : vector<8x32xf32>
    %31 = tpu.matmul %21, %1, %cst_14 {dimension_numbers = #tpu.dot_dimension_numbers<[1], [0], [0], [1], [0, 0, 1, 1], [], []>} : vector<8x16xf32>, vector<16x32xf32>, vector<8x32xf32> -> vector<8x32xf32>
    %cst_15 = arith.constant dense<0.000000e+00> : vector<8x32xf32>
    %32 = tpu.matmul %22, %2, %cst_15 {dimension_numbers = #tpu.dot_dimension_numbers<[1], [0], [0], [1], [0, 0, 1, 1], [], []>} : vector<8x16xf32>, vector<16x32xf32>, vector<8x32xf32> -> vector<8x32xf32>
    %33 = arith.addf %31, %32 : vector<8x32xf32>
    %cst_16 = arith.constant dense<0.000000e+00> : vector<8x32xf32>
    %34 = tpu.matmul %30, %3, %cst_16 {dimension_numbers = #tpu.dot_dimension_numbers<[1], [0], [0], [1], [0, 0, 1, 1], [], []>} : vector<8x16xf32>, vector<16x32xf32>, vector<8x32xf32> -> vector<8x32xf32>
    %35 = arith.addf %33, %34 : vector<8x32xf32>
    %36 = vector.broadcast %8 : vector<1x32xf32> to vector<8x32xf32>
    %37 = arith.addf %35, %36 : vector<8x32xf32>
    %cst_17 = arith.constant 0.000000e+00 : f32
    %38 = vector.broadcast %cst_17 : f32 to vector<8x32xf32>
    %39 = arith.maximumf %37, %38 : vector<8x32xf32>
    %40 = vector.broadcast %9 : vector<1x32xf32> to vector<8x32xf32>
    %41 = arith.mulf %39, %40 : vector<8x32xf32>
    %cst_18 = arith.constant dense<0.000000e+00> : vector<8xf32>
    %42 = vector.multi_reduction <add>, %41, %cst_18 [1] : vector<8x32xf32> to vector<8xf32>
    %43 = vector.shape_cast %42 : vector<8xf32> to vector<8x1xf32>
    %44 = vector.broadcast %10 : vector<1x1xf32> to vector<8x1xf32>
    %45 = arith.addf %43, %44 : vector<8x1xf32>
    %cst_19 = arith.constant 0.000000e+00 : f32
    %46 = vector.broadcast %cst_19 : f32 to vector<8x1xf32>
    %47 = arith.maximumf %45, %46 : vector<8x1xf32>
    %c0_20 = arith.constant 0 : index
    %c0_21 = arith.constant 0 : index
    %48 = vector.load %arg4[%c0_20, %c0_21] : memref<8x1xf32, #tpu.memory_space<vmem>>, vector<8x1xf32>
    tpu.vector_store %arg4[%c0_20, %c0_21], %47 {strides = array<i32>} : memref<8x1xf32, #tpu.memory_space<vmem>>, vector<8x1xf32>,
    return
  }
  func.func @transform_0(%arg0: i32) -> (i32, i32, i32) {
    %c0_i32 = arith.constant 0 : i32
    %c0_i32_0 = arith.constant 0 : i32
    %c0_i32_1 = arith.constant 0 : i32
    return %c0_i32, %arg0, %c0_i32_0 : i32, i32, i32
  }
  func.func @transform_1(%arg0: i32) -> (i32, i32) {
    %c0_i32 = arith.constant 0 : i32
    %c0_i32_0 = arith.constant 0 : i32
    return %arg0, %c0_i32 : i32, i32
  }
  func.func @transform_2(%arg0: i32) -> (i32, i32) {
    %c0_i32 = arith.constant 0 : i32
    %c0_i32_0 = arith.constant 0 : i32
    %c0_i32_1 = arith.constant 0 : i32
    return %c0_i32, %c0_i32_0 : i32, i32
  }
  func.func @transform_3(%arg0: i32) -> (i32, i32) {
    %c0_i32 = arith.constant 0 : i32
    %c0_i32_0 = arith.constant 0 : i32
    return %arg0, %c0_i32 : i32, i32
  }
}

</mosaic_0001>

<llo_original>
// kernel: tpu_custom_call.1
$region0: #{tpu_custom_call.1}
  #allocation0 [shape = 'u32[]', space=smem, size = 0x4, offset = 0x4, fixed_abs, tag = 'smem constant byte address 0x4 - core index']
  #allocation1 [shape = 'u32[144,128]{1,0:T(1,128)}', space=vmem, size = 0x12000, scoped, tag = 'internal scratch']
  %s0 = inlined_call_operand.hbm [shape: f32[2,8,16], index: 0, kind: input, shape index: {}]
  %s1 = inlined_call_operand.vmem [shape: f32[8,1], index: 1, kind: input, shape index: {}]
  %s2 = inlined_call_operand.hbm [shape: f32[72,128], index: 2, kind: input, shape index: {}]
  %s3 = inlined_call_operand.vmem [shape: f32[8,1], index: 3, kind: output, shape index: {}]
  %s4 = sld [smem:[#allocation0]]
  $region30: #{tpu_custom_call.1} parent=0
    _
  %s6 = ssub.s32 1, %s4
  %s7 = scalar_select 0, %s6, %s4
  $region1: #{tpu_custom_call.1} parent=0
    #allocation2 [shape = 'u8[8192]{0}', space=vmem, size = 0x2000, scoped, tag = 'input window, operand 0, single buffered']
    #allocation3 [shape = 's32[1]{0}', space=sflag, size = 0x4, scoped, tag = 'scoped memory for tpu_custom_call.1']
    #allocation4 [shape = 'u8[36864]{0}', space=vmem, size = 0x9000, scoped, tag = 'input window, operand 2, single buffered']
    #allocation5 [shape = 's32[1]{0}', space=sflag, size = 0x4, scoped, tag = 'scoped memory for tpu_custom_call.1']
    %8 = vsyncpa [#allocation3], 0
    %9 = vsyncpa [#allocation5], 0
    // Predicated region
    $region2: #{tpu_custom_call.1} parent=1 // pred_check
      _
    $region3: #{tpu_custom_call.1} parent=1 // pred_check_branch
      %11 = sbr.rel (0) target = $region5
    $region4: #{tpu_custom_call.1} parent=1 // pred_region
      %s13 = ssub.s32 256, 256
      %14 = vsyncadd [#allocation3], %s13
      %s15 = sshll.u32 [#allocation2], 4
      %s16 = int_to_ptr.vmem [resolvable:$true] %s15
      %21 = dma.hbm_to_vmem [thread:$0]  %s0, 256, %s16, [#allocation3], 128, 128, 8
    $region5: #{tpu_custom_call.1} parent=1 // pred_fallthru
      _
    // Predicated region
    $region6: #{tpu_custom_call.1} parent=1 // pred_check
      _
    $region7: #{tpu_custom_call.1} parent=1 // pred_check_branch
      %23 = sbr.rel (0) target = $region9
    $region8: #{tpu_custom_call.1} parent=1 // pred_region
      _
    $region9: #{tpu_custom_call.1} parent=1 // pred_fallthru
      _
    // Predicated region
    $region10: #{tpu_custom_call.1} parent=1 // pred_check
      _
    $region11: #{tpu_custom_call.1} parent=1 // pred_check_branch
      %25 = sbr.rel (0) target = $region13
    $region12: #{tpu_custom_call.1} parent=1 // pred_region
      %s27 = ssub.s32 1152, 1152
      %28 = vsyncadd [#allocation5], %s27
      %s29 = sshll.u32 [#allocation4], 4
      %s30 = int_to_ptr.vmem [resolvable:$true] %s29
      %35 = dma.hbm_to_vmem [thread:$0]  %s2, 1152, %s30, [#allocation5], 128, 128, 8
    $region13: #{tpu_custom_call.1} parent=1 // pred_fallthru
      _
    // Predicated region
    $region14: #{tpu_custom_call.1} parent=1 // pred_check
      _
    $region15: #{tpu_custom_call.1} parent=1 // pred_check_branch
      %37 = sbr.rel (0) target = $region17
    $region16: #{tpu_custom_call.1} parent=1 // pred_region
      %38 = dma.done [#allocation3], 256
    $region17: #{tpu_custom_call.1} parent=1 // pred_fallthru
      _
    // Predicated region
    $region18: #{tpu_custom_call.1} parent=1 // pred_check
      _
    $region19: #{tpu_custom_call.1} parent=1 // pred_check_branch
      %40 = sbr.rel (0) target = $region21
    $region20: #{tpu_custom_call.1} parent=1 // pred_region
      %41 = dma.done [#allocation5], 1152
    $region21: #{tpu_custom_call.1} parent=1 // pred_fallthru
      _
    %v42 = vld [vmem:[#allocation4] sm:$0xff]
    %v43 = vld [vmem:[#allocation4 + $0x8] sm:$0xff]
    %v44 = vld [vmem:[#allocation4 + $0x10] sm:$0xff]
    %v45 = vld [vmem:[#allocation4 + $0x18] sm:$0xff]
    %v46 = vld [vmem:[#allocation4 + $0x20] sm:$0xff]
    %v47 = vld [vmem:[#allocation4 + $0x28] sm:$0xff]
    %v48 = vld [vmem:[#allocation4 + $0x30] sm:$0xff]
    %v49 = vld [vmem:[#allocation4 + $0x38] sm:$0xff]
    %v50 = vld [vmem:[#allocation4 + $0x40] sm:$0xff]
    %v51 = vld [vmem:[#allocation2] sm:$0xff]
    %s52 = scalar_lea.vmem [#allocation2], 8
    %v53 = vld [vmem:[%s52] sm:$0xff]
    %v54 = vlaneseq
    %v55 = vshrl.u32 %v54, 7
    %v56 = vsub.s32 0, %v55
    %v57 = vrot.slane %v50, %v56
    %vm58 = vcmask 130048
    %v60 = vsel %vm58, %v51, 0
    %v63 = vsel %vm58, %v53, 0
    %65 = vmatprep.subr.mxu0 0.0
    %66 = vmatpush1.msra.mxu0 0.0
    %67 = vmatprep.subr.mxu0 0.0
    %68 = vmatpush1.msra.mxu0 0.0
    %69 = vmatprep.subr.mxu0 0.0
    %70 = vmatpush1.msra.mxu0 0.0
    %71 = vmatprep.subr.mxu0 0.0
    %72 = vmatpush1.msra.mxu0 0.0
    %73 = vmatprep.subr.mxu0 0.0
    %74 = vmatpush1.msra.mxu0 0.0
    %75 = vmatprep.subr.mxu0 0.0
    %76 = vmatpush1.msra.mxu0 0.0
    %77 = vmatprep.subr.mxu0 0.0
    %78 = vmatpush1.msra.mxu0 0.0
    %79 = vmatprep.subr.mxu0 0.0
    %80 = vmatpush1.msra.mxu0 0.0
    %81 = vmatprep.subr.mxu0 0.0
    %82 = vmatpush1.msra.mxu0 0.0
    %83 = vmatprep.subr.mxu0 0.0
    %84 = vmatpush1.msra.mxu0 0.0
    %85 = vmatprep.subr.mxu0 0.0
    %86 = vmatpush1.msra.mxu0 0.0
    %87 = vmatprep.subr.mxu0 0.0
    %88 = vmatpush1.msra.mxu0 0.0
    %89 = vmatprep.subr.mxu0 0.0
    %90 = vmatpush1.msra.mxu0 0.0
    %91 = vmatprep.subr.mxu0 0.0
    %92 = vmatpush1.msra.mxu0 0.0
    %93 = vmatprep.subr.mxu0 0.0
    %94 = vmatpush1.msra.mxu0 %v43
    %95 = vmatprep.subr.mxu0 0.0
    %96 = vmatpush1.msra.mxu0 %v42
    %97 = vmatprep.subr.mxu0 0.0
    %98 = vmatpush2.msra.mxu0 0.0
    %99 = vmatprep.subr.mxu0 0.0
    %100 = vmatpush2.msra.mxu0 0.0
    %101 = vmatprep.subr.mxu0 0.0
    %102 = vmatpush2.msra.mxu0 0.0
    %103 = vmatprep.subr.mxu0 0.0
    %104 = vmatpush2.msra.mxu0 0.0
    %105 = vmatprep.subr.mxu0 0.0
    %106 = vmatpush2.msra.mxu0 0.0
    %107 = vmatprep.subr.mxu0 0.0
    %108 = vmatpush2.msra.mxu0 0.0
    %109 = vmatprep.subr.mxu0 0.0
    %110 = vmatpush2.msra.mxu0 0.0
    %111 = vmatprep.subr.mxu0 0.0
    %112 = vmatpush2.msra.mxu0 0.0
    %113 = vmatprep.subr.mxu0 0.0
    %114 = vmatpush2.msra.mxu0 0.0
    %115 = vmatprep.subr.mxu0 0.0
    %116 = vmatpush2.msra.mxu0 0.0
    %117 = vmatprep.subr.mxu0 0.0
    %118 = vmatpush2.msra.mxu0 0.0
    %119 = vmatprep.subr.mxu0 0.0
    %120 = vmatpush2.msra.mxu0 0.0
    %121 = vmatprep.subr.mxu0 0.0
    %122 = vmatpush2.msra.mxu0 0.0
    %123 = vmatprep.subr.mxu0 0.0
    %124 = vmatpush2.msra.mxu0 0.0
    %125 = vmatprep.subr.mxu0 0.0
    %126 = vmatpush2.msra.mxu0 0.0
    %127 = vmatprep.subr.mxu0 0.0
    %128 = vmatpush2.msra.mxu0 0.0
    %129 = vmatprep.mubr.f32.mxu0 0.0
    %130 = vmatmul.mubr.f32.gmra.mxu0 %v60
    %v131 = vpop.f32.mrf.mxu0
    %v132 = vadd.f32 %v57, %v131
    %v133 = vpop.f32.mrf.mxu0
    %134 = vmatprep.mubr.f32.mxu0 0.0
    %135 = vmatmul.mubr.f32.gmra.mxu0 %v63
    %v136 = vpop.f32.mrf.mxu0
    %v137 = vadd.f32 %v57, %v136
    %v138 = vpop.f32.mrf.mxu0
    %139 = vdwg.mxu0
    %v140 = vmax.f32 %v132, 0.0
    %v141 = vmax.f32 %v137, 0.0
    %v142 = vld [vmem:[%s1] sm:$0xff]
    %144 = vset.pattern.permute.xlu0 0
    %145 = vperm.xlu0 %144, %v142
    %v146 = vpop.permute.xlu0 %145
    %v148 = vlaneseq
    %v149 = vshrl.u32 %v148, 7
    %v150 = vsub.s32 1, %v149
    %v151 = vrot.slane %v50, %v150
    %v152 = vmul.f32 %v146, %v151
    %v153 = vlaneseq
    %v154 = vshrl.u32 %v153, 7
    %v155 = vsub.s32 2, %v154
    %v156 = vrot.slane %v50, %v155
    %v157 = vadd.f32 %v152, %v156
    %v158 = vmax.f32 %v157, 0.0
    %v160 = vsel %vm58, %v141, 0
    %162 = vmatprep.subr.mxu0 0.0
    %163 = vmatpush1.msra.mxu0 0.0
    %164 = vmatprep.subr.mxu0 0.0
    %165 = vmatpush1.msra.mxu0 0.0
    %166 = vmatprep.subr.mxu0 0.0
    %167 = vmatpush1.msra.mxu0 0.0
    %168 = vmatprep.subr.mxu0 0.0
    %169 = vmatpush1.msra.mxu0 0.0
    %170 = vmatprep.subr.mxu0 0.0
    %171 = vmatpush1.msra.mxu0 0.0
    %172 = vmatprep.subr.mxu0 0.0
    %173 = vmatpush1.msra.mxu0 0.0
    %174 = vmatprep.subr.mxu0 0.0
    %175 = vmatpush1.msra.mxu0 0.0
    %176 = vmatprep.subr.mxu0 0.0
    %177 = vmatpush1.msra.mxu0 0.0
    %178 = vmatprep.subr.mxu0 0.0
    %179 = vmatpush1.msra.mxu0 0.0
    %180 = vmatprep.subr.mxu0 0.0
    %181 = vmatpush1.msra.mxu0 0.0
    %182 = vmatprep.subr.mxu0 0.0
    %183 = vmatpush1.msra.mxu0 0.0
    %184 = vmatprep.subr.mxu0 0.0
    %185 = vmatpush1.msra.mxu0 0.0
    %186 = vmatprep.subr.mxu0 0.0
    %187 = vmatpush1.msra.mxu0 0.0
    %188 = vmatprep.subr.mxu0 0.0
    %189 = vmatpush1.msra.mxu0 0.0
    %190 = vmatprep.subr.mxu0 0.0
    %191 = vmatpush1.msra.mxu0 %v47
    %192 = vmatprep.subr.mxu0 0.0
    %193 = vmatpush1.msra.mxu0 %v46
    %194 = vmatprep.subr.mxu0 0.0
    %195 = vmatpush2.msra.mxu0 0.0
    %196 = vmatprep.subr.mxu0 0.0
    %197 = vmatpush2.msra.mxu0 0.0
    %198 = vmatprep.subr.mxu0 0.0
    %199 = vmatpush2.msra.mxu0 0.0
    %200 = vmatprep.subr.mxu0 0.0
    %201 = vmatpush2.msra.mxu0 0.0
    %202 = vmatprep.subr.mxu0 0.0
    %203 = vmatpush2.msra.mxu0 0.0
    %204 = vmatprep.subr.mxu0 0.0
    %205 = vmatpush2.msra.mxu0 0.0
    %206 = vmatprep.subr.mxu0 0.0
    %207 = vmatpush2.msra.mxu0 0.0
    %208 = vmatprep.subr.mxu0 0.0
    %209 = vmatpush2.msra.mxu0 0.0
    %210 = vmatprep.subr.mxu0 0.0
    %211 = vmatpush2.msra.mxu0 0.0
    %212 = vmatprep.subr.mxu0 0.0
    %213 = vmatpush2.msra.mxu0 0.0
    %214 = vmatprep.subr.mxu0 0.0
    %215 = vmatpush2.msra.mxu0 0.0
    %216 = vmatprep.subr.mxu0 0.0
    %217 = vmatpush2.msra.mxu0 0.0
    %218 = vmatprep.subr.mxu0 0.0
    %219 = vmatpush2.msra.mxu0 0.0
    %220 = vmatprep.subr.mxu0 0.0
    %221 = vmatpush2.msra.mxu0 0.0
    %222 = vmatprep.subr.mxu0 0.0
    %223 = vmatpush2.msra.mxu0 0.0
    %224 = vmatprep.subr.mxu0 0.0
    %225 = vmatpush2.msra.mxu0 0.0
    %226 = vmatprep.mubr.f32.mxu0 0.0
    %227 = vmatmul.mubr.f32.gmra.mxu0 %v160
    %v228 = vpop.f32.mrf.mxu0
    %v229 = vadd.f32 0.0, %v228
    %v230 = vpop.f32.mrf.mxu0
    %231 = vdwg.mxu0
    %v233 = vsel %vm58, %v140, 0
    %235 = vmatprep.subr.mxu0 0.0
    %236 = vmatpush1.msra.mxu0 0.0
    %237 = vmatprep.subr.mxu0 0.0
    %238 = vmatpush1.msra.mxu0 0.0
    %239 = vmatprep.subr.mxu0 0.0
    %240 = vmatpush1.msra.mxu0 0.0
    %241 = vmatprep.subr.mxu0 0.0
    %242 = vmatpush1.msra.mxu0 0.0
    %243 = vmatprep.subr.mxu0 0.0
    %244 = vmatpush1.msra.mxu0 0.0
    %245 = vmatprep.subr.mxu0 0.0
    %246 = vmatpush1.msra.mxu0 0.0
    %247 = vmatprep.subr.mxu0 0.0
    %248 = vmatpush1.msra.mxu0 0.0
    %249 = vmatprep.subr.mxu0 0.0
    %250 = vmatpush1.msra.mxu0 0.0
    %251 = vmatprep.subr.mxu0 0.0
    %252 = vmatpush1.msra.mxu0 0.0
    %253 = vmatprep.subr.mxu0 0.0
    %254 = vmatpush1.msra.mxu0 0.0
    %255 = vmatprep.subr.mxu0 0.0
    %256 = vmatpush1.msra.mxu0 0.0
    %257 = vmatprep.subr.mxu0 0.0
    %258 = vmatpush1.msra.mxu0 0.0
    %259 = vmatprep.subr.mxu0 0.0
    %260 = vmatpush1.msra.mxu0 0.0
    %261 = vmatprep.subr.mxu0 0.0
    %262 = vmatpush1.msra.mxu0 0.0
    %263 = vmatprep.subr.mxu0 0.0
    %264 = vmatpush1.msra.mxu0 %v45
    %265 = vmatprep.subr.mxu0 0.0
    %266 = vmatpush1.msra.mxu0 %v44
    %267 = vmatprep.subr.mxu0 0.0
    %268 = vmatpush2.msra.mxu0 0.0
    %269 = vmatprep.subr.mxu0 0.0
    %270 = vmatpush2.msra.mxu0 0.0
    %271 = vmatprep.subr.mxu0 0.0
    %272 = vmatpush2.msra.mxu0 0.0
    %273 = vmatprep.subr.mxu0 0.0
    %274 = vmatpush2.msra.mxu0 0.0
    %275 = vmatprep.subr.mxu0 0.0
    %276 = vmatpush2.msra.mxu0 0.0
    %277 = vmatprep.subr.mxu0 0.0
    %278 = vmatpush2.msra.mxu0 0.0
    %279 = vmatprep.subr.mxu0 0.0
    %280 = vmatpush2.msra.mxu0 0.0
    %281 = vmatprep.subr.mxu0 0.0
    %282 = vmatpush2.msra.mxu0 0.0
    %283 = vmatprep.subr.mxu0 0.0
    %284 = vmatpush2.msra.mxu0 0.0
    %285 = vmatprep.subr.mxu0 0.0
    %286 = vmatpush2.msra.mxu0 0.0
    %287 = vmatprep.subr.mxu0 0.0
    %288 = vmatpush2.msra.mxu0 0.0
    %289 = vmatprep.subr.mxu0 0.0
    %290 = vmatpush2.msra.mxu0 0.0
    %291 = vmatprep.subr.mxu0 0.0
    %292 = vmatpush2.msra.mxu0 0.0
    %293 = vmatprep.subr.mxu0 0.0
    %294 = vmatpush2.msra.mxu0 0.0
    %295 = vmatprep.subr.mxu0 0.0
    %296 = vmatpush2.msra.mxu0 0.0
    %297 = vmatprep.subr.mxu0 0.0
    %298 = vmatpush2.msra.mxu0 0.0
    %299 = vmatprep.mubr.f32.mxu0 0.0
    %300 = vmatmul.mubr.f32.gmra.mxu0 %v233
    %v301 = vpop.f32.mrf.mxu0
    %v302 = vadd.f32 %v229, %v301
    %v303 = vpop.f32.mrf.mxu0
    %304 = vdwg.mxu0
    %v306 = vsel %vm58, %v158, 0
    %308 = vmatprep.subr.mxu0 0.0
    %309 = vmatpush1.msra.mxu0 0.0
    %310 = vmatprep.subr.mxu0 0.0
    %311 = vmatpush1.msra.mxu0 0.0
    %312 = vmatprep.subr.mxu0 0.0
    %313 = vmatpush1.msra.mxu0 0.0
    %314 = vmatprep.subr.mxu0 0.0
    %315 = vmatpush1.msra.mxu0 0.0
    %316 = vmatprep.subr.mxu0 0.0
    %317 = vmatpush1.msra.mxu0 0.0
    %318 = vmatprep.subr.mxu0 0.0
    %319 = vmatpush1.msra.mxu0 0.0
    %320 = vmatprep.subr.mxu0 0.0
    %321 = vmatpush1.msra.mxu0 0.0
    %322 = vmatprep.subr.mxu0 0.0
    %323 = vmatpush1.msra.mxu0 0.0
    %324 = vmatprep.subr.mxu0 0.0
    %325 = vmatpush1.msra.mxu0 0.0
    %326 = vmatprep.subr.mxu0 0.0
    %327 = vmatpush1.msra.mxu0 0.0
    %328 = vmatprep.subr.mxu0 0.0
    %329 = vmatpush1.msra.mxu0 0.0
    %330 = vmatprep.subr.mxu0 0.0
    %331 = vmatpush1.msra.mxu0 0.0
    %332 = vmatprep.subr.mxu0 0.0
    %333 = vmatpush1.msra.mxu0 0.0
    %334 = vmatprep.subr.mxu0 0.0
    %335 = vmatpush1.msra.mxu0 0.0
    %336 = vmatprep.subr.mxu0 0.0
    %337 = vmatpush1.msra.mxu0 %v49
    %338 = vmatprep.subr.mxu0 0.0
    %339 = vmatpush1.msra.mxu0 %v48
    %340 = vmatprep.subr.mxu0 0.0
    %341 = vmatpush2.msra.mxu0 0.0
    %342 = vmatprep.subr.mxu0 0.0
    %343 = vmatpush2.msra.mxu0 0.0
    %344 = vmatprep.subr.mxu0 0.0
    %345 = vmatpush2.msra.mxu0 0.0
    %346 = vmatprep.subr.mxu0 0.0
    %347 = vmatpush2.msra.mxu0 0.0
    %348 = vmatprep.subr.mxu0 0.0
    %349 = vmatpush2.msra.mxu0 0.0
    %350 = vmatprep.subr.mxu0 0.0
    %351 = vmatpush2.msra.mxu0 0.0
    %352 = vmatprep.subr.mxu0 0.0
    %353 = vmatpush2.msra.mxu0 0.0
    %354 = vmatprep.subr.mxu0 0.0
    %355 = vmatpush2.msra.mxu0 0.0
    %356 = vmatprep.subr.mxu0 0.0
    %357 = vmatpush2.msra.mxu0 0.0
    %358 = vmatprep.subr.mxu0 0.0
    %359 = vmatpush2.msra.mxu0 0.0
    %360 = vmatprep.subr.mxu0 0.0
    %361 = vmatpush2.msra.mxu0 0.0
    %362 = vmatprep.subr.mxu0 0.0
    %363 = vmatpush2.msra.mxu0 0.0
    %364 = vmatprep.subr.mxu0 0.0
    %365 = vmatpush2.msra.mxu0 0.0
    %366 = vmatprep.subr.mxu0 0.0
    %367 = vmatpush2.msra.mxu0 0.0
    %368 = vmatprep.subr.mxu0 0.0
    %369 = vmatpush2.msra.mxu0 0.0
    %370 = vmatprep.subr.mxu0 0.0
    %371 = vmatpush2.msra.mxu0 0.0
    %372 = vmatprep.mubr.f32.mxu0 0.0
    %373 = vmatmul.mubr.f32.gmra.mxu0 %v306
    %v374 = vpop.f32.mrf.mxu0
    %v375 = vadd.f32 0.0, %v374
    %v376 = vpop.f32.mrf.mxu0
    %377 = vdwg.mxu0
    %v378 = vadd.f32 %v302, %v375
    %v379 = vlaneseq
    %v380 = vshrl.u32 %v379, 7
    %v381 = vsub.s32 3, %v380
    %v382 = vrot.slane %v50, %v381
    %v383 = vadd.f32 %v378, %v382
    %v384 = vmax.f32 %v383, 0.0
    %v385 = vlaneseq
    %v386 = vshrl.u32 %v385, 7
    %v387 = vsub.s32 4, %v386
    %v388 = vrot.slane %v50, %v387
    %v389 = vmul.f32 %v384, %v388
    %vm390 = vcmask 261120
    %v391 = vsel %vm390, %v389, 0.0
    %392 = vadd.xlane.f32.xlu0 %v391
    %v393 = vpop.xlane.xlu0 %392
    %v394 = vlaneseq
    %v395 = vshrl.u32 %v394, 7
    %v396 = vsub.s32 5, %v395
    %v397 = vrot.slane %v50, %v396
    %v398 = vadd.f32 %v393, %v397
    %v399 = vmax.f32 %v398, 0.0
    %vm400 = vcmask 7168
    %401 = vst.msk [vmem:[%s3] sm:$0xff] %vm400, %v399
    // Predicated region
    $region22: #{tpu_custom_call.1} parent=1 // pred_check
      _
    $region23: #{tpu_custom_call.1} parent=1 // pred_check_branch
      %403 = sbr.rel (0) target = $region25
    $region24: #{tpu_custom_call.1} parent=1 // pred_region
      _
    $region25: #{tpu_custom_call.1} parent=1 // pred_fallthru
      _
    // Predicated region
    $region26: #{tpu_custom_call.1} parent=1 // pred_check
      _
    $region27: #{tpu_custom_call.1} parent=1 // pred_check_branch
      %405 = sbr.rel (0) target = $region29
    $region28: #{tpu_custom_call.1} parent=1 // pred_region
      _
    $region29: #{tpu_custom_call.1} parent=1 // pred_fallthru
      _
    %406 = vsyncpa [#allocation3], 1
    %407 = vsyncpa [#allocation5], 1

</llo_original>
